<compile_context>
chip_gen: v7x
topology: tpu7x:2x2x1
jax: 0.10.0
libtpu: 0.0.40
codegen_flags: <defaults>
</compile_context>

<pallas_src>
import functools

import jax
import jax.numpy as jnp
from jax.experimental import pallas as pl
from jax.experimental.pallas import tpu as pltpu

LANE = 128                         # lane tile (hardware)
SUB = 8                            # sublane tile (hardware)
BLOCK_ROWS = 1024                  # rows per tile in the two-pass path (512 KiB f32)
NCORES = 2                         # leading "parallel" axis for the stats reduction
FUSED_MAX_BYTES = 4 * 1024 * 1024  # use the fused single-pass path below this (f32 slab)


# ----------------------------- fused fast path ------------------------------
def _fused_kernel(n_valid, padded, x_ref, o_ref):
    """Whole slab resident in VMEM: one read, exact centered variance, one write."""
    x = x_ref[...].astype(jnp.float32)
    n = jnp.float32(n_valid)
    s = jnp.sum(x)                               # zero padding contributes 0
    mean = s / n
    d = x - mean
    if padded:
        rows, lanes = x.shape
        flat_idx = (jax.lax.broadcasted_iota(jnp.int32, (rows, lanes), 0) * lanes
                    + jax.lax.broadcasted_iota(jnp.int32, (rows, lanes), 1))
        d = jnp.where(flat_idx < n_valid, d, 0.0)
    var = jnp.sum(d * d) / (n - 1.0)             # unbiased (ddof=1)
    inv_std = jax.lax.rsqrt(var)
    o_ref[...] = (d * inv_std).astype(o_ref.dtype)


# ----------------------------- two-pass path --------------------------------
def _stats_kernel(x_ref, sum_ref, sq_ref):
    """Per-lane f32 vector accumulation (VPU only); scalar reduce deferred to glue."""
    @pl.when(pl.program_id(1) == 0)
    def _():
        sum_ref[...] = jnp.zeros_like(sum_ref)
        sq_ref[...] = jnp.zeros_like(sq_ref)

    x = x_ref[...].astype(jnp.float32)           # (BLOCK_ROWS, LANE)
    xr = x.reshape(-1, SUB, LANE)                # vreg-aligned split, no data movement
    sum_ref[...] += jnp.sum(xr, axis=0)          # (8,128) elementwise adds
    sq_ref[...] += jnp.sum(xr * xr, axis=0)


def _norm_kernel(scale_ref, bias_ref, x_ref, o_ref):
    """out = x * inv_std + (-mean * inv_std)  -- single FMA per element."""
    x = x_ref[...].astype(jnp.float32)
    o_ref[...] = (x * scale_ref[0, 0] + bias_ref[0, 0]).astype(o_ref.dtype)


# --------------------------------- wrapper ----------------------------------
def global_normalization(x, *, force_two_pass=False):
    """Pallas implementation of GlobalNormalization.forward (any float shape)."""
    orig_shape = x.shape
    orig_dtype = x.dtype
    total = int(x.size)

    flat = x.reshape(-1)
    rows = -(-total // LANE)

    use_fused = (not force_two_pass) and (
        (-(-rows // SUB) * SUB) * LANE * 4 <= FUSED_MAX_BYTES)

    if use_fused:
        rows_pad = -(-rows // SUB) * SUB
        n_pad = rows_pad * LANE
        padded = n_pad != total
        if padded:
            flat = jnp.pad(flat, (0, n_pad - total))
        x2 = flat.reshape(rows_pad, LANE)

        out2 = pl.pallas_call(
            functools.partial(_fused_kernel, total, padded),
            out_shape=jax.ShapeDtypeStruct((rows_pad, LANE), orig_dtype),
            compiler_params=pltpu.CompilerParams(
                vmem_limit_bytes=32 * 1024 * 1024),
        )(x2)

        out_flat = out2.reshape(-1)
        if padded:
            out_flat = out_flat[:total]
        return out_flat.reshape(orig_shape)

    # ---------------- two-pass tiled path (large tensors) ----------------
    chunk = NCORES * BLOCK_ROWS
    rows_pad = -(-rows // chunk) * chunk
    n_pad = rows_pad * LANE
    padded = n_pad != total
    if padded:
        # TODO(synk): the zero-pad copy could be avoided with an in-kernel
        # masked tail tile; zero padding keeps the hot loops mask-free.
        flat = jnp.pad(flat, (0, n_pad - total))
    x2 = flat.reshape(rows_pad, LANE)
    ntiles = rows_pad // BLOCK_ROWS
    tiles_per_core = ntiles // NCORES

    # Pass 1: per-lane partial sum / sum-of-squares, one slab per core.
    part_sum, part_sq = pl.pallas_call(
        _stats_kernel,
        out_shape=(jax.ShapeDtypeStruct((NCORES * SUB, LANE), jnp.float32),
                   jax.ShapeDtypeStruct((NCORES * SUB, LANE), jnp.float32)),
        grid_spec=pltpu.PrefetchScalarGridSpec(
            num_scalar_prefetch=0,
            grid=(NCORES, tiles_per_core),
            in_specs=[pl.BlockSpec(
                (BLOCK_ROWS, LANE),
                lambda c, i: (c * tiles_per_core + i, 0))],
            out_specs=[
                pl.BlockSpec((SUB, LANE), lambda c, i: (c, 0)),
                pl.BlockSpec((SUB, LANE), lambda c, i: (c, 0)),
            ],
        ),
        compiler_params=pltpu.CompilerParams(
            dimension_semantics=("parallel", "arbitrary")),
    )(x2)

    # Glue: collapse partials, derive scale/bias (a handful of tiny scalar ops).
    n = jnp.float32(total)
    s = jnp.sum(part_sum)
    sq = jnp.sum(part_sq)
    mean = s / n
    var = (sq - s * s / n) / (n - 1.0)
    inv_std = jax.lax.rsqrt(jnp.maximum(var, 0.0))
    scale = jnp.reshape(inv_std, (1, 1)).astype(jnp.float32)
    bias = jnp.reshape(-mean * inv_std, (1, 1)).astype(jnp.float32)

    # Pass 2: elementwise FMA, big tiles, fully parallel (megacore-sharded).
    out2 = pl.pallas_call(
        _norm_kernel,
        out_shape=jax.ShapeDtypeStruct((rows_pad, LANE), orig_dtype),
        grid_spec=pltpu.PrefetchScalarGridSpec(
            num_scalar_prefetch=0,
            grid=(ntiles,),
            in_specs=[
                pl.BlockSpec((1, 1), lambda i: (0, 0), memory_space=pltpu.SMEM),
                pl.BlockSpec((1, 1), lambda i: (0, 0), memory_space=pltpu.SMEM),
                pl.BlockSpec((BLOCK_ROWS, LANE), lambda i: (i, 0)),
            ],
            out_specs=pl.BlockSpec((BLOCK_ROWS, LANE), lambda i: (i, 0)),
        ),
        compiler_params=pltpu.CompilerParams(
            dimension_semantics=("parallel",)),
    )(scale, bias, x2)

    out_flat = out2.reshape(-1)
    if padded:
        out_flat = out_flat[:total]
    return out_flat.reshape(orig_shape)


if __name__ == "__main__":
    key = jax.random.PRNGKey(0)
    # NCHW latent, conv-style: (batch=2, C=4, H=16, W=16)
    x = jax.random.normal(key, (2, 4, 16, 16), dtype=jnp.float32) * 3.0 + 1.5

    # Reference (pure JAX; unbiased std, identical to torch.Tensor.std()).
    ref_mean = jnp.mean(x)
    ref_std = jnp.sqrt(jnp.sum((x - ref_mean) ** 2) / (x.size - 1))
    ref = (x - ref_mean) / ref_std

    # Fast fused path (the common case: latent fits in VMEM).
    out = jax.block_until_ready(global_normalization(x))
    assert out.shape == x.shape and out.dtype == x.dtype
    assert jnp.max(jnp.abs(out - ref)) < 1e-5

    # Two-pass tiled path (what large tensors take); forced here on the same
    # small input to also exercise the big-tile stats + norm kernels.
    out2 = jax.block_until_ready(global_normalization(x, force_two_pass=True))
    assert out2.shape == x.shape and out2.dtype == x.dtype
    assert jnp.max(jnp.abs(out2 - ref)) < 1e-4

    print("KERNEL_OK")
</pallas_src>

<mosaic_0001>
module attributes {stable_mosaic.version = 11 : i64} {
  func.func @_fused_kernel(%arg0: memref<16x128xf32, #tpu.memory_space<vmem>>, %arg1: memref<16x128xf32, #tpu.memory_space<vmem>>) attributes {dimension_semantics = [], scalar_prefetch = 0 : i64, scratch_operands = 0 : i64, tpu.core_type = #tpu.core_type<tc>} {
    %c0 = arith.constant 0 : index
    %c0_0 = arith.constant 0 : index
    %0 = vector.load %arg0[%c0, %c0_0] : memref<16x128xf32, #tpu.memory_space<vmem>>, vector<16x128xf32>
    %1 = vector.shape_cast %0 : vector<16x128xf32> to vector<1x16x128xf32>
    %cst = arith.constant dense<0.000000e+00> : vector<1xf32>
    %2 = vector.multi_reduction <add>, %1, %cst [1, 2] : vector<1x16x128xf32> to vector<1xf32>
    %3 = vector.shape_cast %2 : vector<1xf32> to vector<1x1x1xf32>
    %4 = vector.extract %3[0, 0, 0] : f32 from vector<1x1x1xf32>
    %cst_1 = arith.constant 2.048000e+03 : f32
    %5 = arith.divf %4, %cst_1 : f32
    %6 = vector.broadcast %5 : f32 to vector<16x128xf32>
    %7 = arith.subf %0, %6 : vector<16x128xf32>
    %8 = arith.mulf %7, %7 : vector<16x128xf32>
    %9 = vector.shape_cast %8 : vector<16x128xf32> to vector<1x16x128xf32>
    %cst_2 = arith.constant dense<0.000000e+00> : vector<1xf32>
    %10 = vector.multi_reduction <add>, %9, %cst_2 [1, 2] : vector<1x16x128xf32> to vector<1xf32>
    %11 = vector.shape_cast %10 : vector<1xf32> to vector<1x1x1xf32>
    %12 = vector.extract %11[0, 0, 0] : f32 from vector<1x1x1xf32>
    %cst_3 = arith.constant 2.048000e+03 : f32
    %cst_4 = arith.constant 1.000000e+00 : f32
    %13 = arith.subf %cst_3, %cst_4 : f32
    %14 = arith.divf %12, %13 : f32
    %15 = math.rsqrt %14 : f32
    %16 = vector.broadcast %15 : f32 to vector<16x128xf32>
    %17 = arith.mulf %7, %16 : vector<16x128xf32>
    %c0_5 = arith.constant 0 : index
    %c0_6 = arith.constant 0 : index
    %18 = vector.load %arg1[%c0_5, %c0_6] : memref<16x128xf32, #tpu.memory_space<vmem>>, vector<16x128xf32>
    tpu.vector_store %arg1[%c0_5, %c0_6], %17 {strides = array<i32>} : memref<16x128xf32, #tpu.memory_space<vmem>>, vector<16x128xf32>,
    return
  }
}

</mosaic_0001>

<llo_original>
// kernel: tpu_custom_call.1
$region0: #{tpu_custom_call.1}
  #allocation0 [shape = 'u32[]', space=smem, size = 0x4, offset = 0x4, fixed_abs, tag = 'smem constant byte address 0x4 - core index']
  #allocation1 [shape = 'u32[144,128]{1,0:T(1,128)}', space=vmem, size = 0x12000, scoped, tag = 'internal scratch']
  %s0 = inlined_call_operand.hbm [shape: f32[16,128], index: 0, kind: input, shape index: {}]
  %s1 = inlined_call_operand.hbm [shape: f32[16,128], index: 1, kind: output, shape index: {}]
  %s2 = sld [smem:[#allocation0]]
  $region18: #{tpu_custom_call.1} parent=0
    _
  %s4 = ssub.s32 1, %s2
  %s5 = scalar_select 0, %s4, %s2
  $region1: #{tpu_custom_call.1} parent=0
    #allocation2 [shape = 'u8[8192]{0}', space=vmem, size = 0x2000, scoped, tag = 'input window, operand 0, single buffered']
    #allocation3 [shape = 's32[1]{0}', space=sflag, size = 0x4, scoped, tag = 'scoped memory for tpu_custom_call.1']
    #allocation4 [shape = 's32[1]{0}', space=sflag, size = 0x4, scoped, tag = 'scoped memory for tpu_custom_call.1']
    #allocation5 [shape = 'u8[8192]{0}', space=vmem, size = 0x2000, scoped, tag = 'output window, operand 0, single buffered']
    %6 = vsyncpa [#allocation3], 0
    %7 = vsyncpa [#allocation4], 0
    // Predicated region
    $region2: #{tpu_custom_call.1} parent=1 // pred_check
      _
    $region3: #{tpu_custom_call.1} parent=1 // pred_check_branch
      %9 = sbr.rel (0) target = $region5
    $region4: #{tpu_custom_call.1} parent=1 // pred_region
      %s11 = ssub.s32 256, 256
      %12 = vsyncadd [#allocation3], %s11
      %s13 = sshll.u32 [#allocation2], 4
      %s14 = int_to_ptr.vmem [resolvable:$true] %s13
      %19 = dma.hbm_to_vmem [thread:$0]  %s0, 256, %s14, [#allocation3], 128, 128, 8
    $region5: #{tpu_custom_call.1} parent=1 // pred_fallthru
      _
    // Predicated region
    $region6: #{tpu_custom_call.1} parent=1 // pred_check
      _
    $region7: #{tpu_custom_call.1} parent=1 // pred_check_branch
      %21 = sbr.rel (0) target = $region9
    $region8: #{tpu_custom_call.1} parent=1 // pred_region
      %22 = dma.done [#allocation3], 256
    $region9: #{tpu_custom_call.1} parent=1 // pred_fallthru
      _
    %v23 = vld [vmem:[#allocation2] sm:$0xff]
    %v24 = vld [vmem:[#allocation2 + $0x8] sm:$0xff]
    %v25 = vadd.f32 %v23, %v24
    %26 = vadd.xlane.f32.xlu0 %v25
    %v27 = vpop.xlane.xlu0 %26
    %v28 = vrot.slane %v27, 4
    %v29 = vadd.f32 %v27, %v28
    %v30 = vrot.slane %v29, 2
    %v31 = vadd.f32 %v29, %v30
    %v32 = vrot.slane %v31, 1
    %v33 = vadd.f32 %v31, %v32
    %s34 = vtos %v33
    %v35 = vrcp.pop 2048.0
    %s36 = vtos %v35
    %s37 = smul.f32 %s34, %s36
    %v38 = vstv %s37
    %v39 = vsub.f32 %v23, %v38
    %v40 = vsub.f32 %v24, %v38
    %v41 = vmul.f32 %v39, %v39
    %v42 = vmul.f32 %v40, %v40
    %v43 = vadd.f32 %v41, %v42
    %44 = vadd.xlane.f32.xlu0 %v43
    %v45 = vpop.xlane.xlu0 %44
    %v46 = vrot.slane %v45, 4
    %v47 = vadd.f32 %v45, %v46
    %v48 = vrot.slane %v47, 2
    %v49 = vadd.f32 %v47, %v48
    %v50 = vrot.slane %v49, 1
    %v51 = vadd.f32 %v49, %v50
    %s52 = vtos %v51
    %v53 = vrcp.pop 2047.0
    %s54 = vtos %v53
    %s55 = smul.f32 %s52, %s54
    %v56 = vstv %s55
    %v57 = vrsqrt.pop %v56
    %s58 = vtos %v57
    %v59 = vstv %s58
    %v60 = vmul.f32 %v39, %v59
    %v61 = vmul.f32 %v40, %v59
    %62 = vst [vmem:[#allocation5] sm:$0xff] %v60
    %63 = vst [vmem:[#allocation5 + $0x8] sm:$0xff] %v61
    // Predicated region
    $region10: #{tpu_custom_call.1} parent=1 // pred_check
      _
    $region11: #{tpu_custom_call.1} parent=1 // pred_check_branch
      %65 = sbr.rel (0) target = $region13
    $region12: #{tpu_custom_call.1} parent=1 // pred_region
      %s67 = ssub.s32 256, 256
      %68 = vsyncadd [#allocation4], %s67
      %s69 = sshll.u32 [#allocation5], 4
      %s70 = int_to_ptr.vmem [resolvable:$true] %s69
      %75 = dma.vmem_to_hbm [thread:$0]  %s70, 256, %s1, [#allocation4], 128, 128, 8
    $region13: #{tpu_custom_call.1} parent=1 // pred_fallthru
      _
    // Predicated region
    $region14: #{tpu_custom_call.1} parent=1 // pred_check
      _
    $region15: #{tpu_custom_call.1} parent=1 // pred_check_branch
      %77 = sbr.rel (0) target = $region17
    $region16: #{tpu_custom_call.1} parent=1 // pred_region
      %78 = dma.done [#allocation4], 256
    $region17: #{tpu_custom_call.1} parent=1 // pred_fallthru
      _
    %79 = vsyncpa [#allocation3], 1
    %80 = vsyncpa [#allocation4], 1

</llo_original>
